<compile_context>
chip_gen: v7x
topology: tpu7x:2x2x1
jax: 0.10.0
libtpu: 0.0.40
codegen_flags: <defaults>
</compile_context>

<pallas_src>
import functools

import jax
import jax.numpy as jnp
import numpy as np
from jax import lax
from jax.experimental import pallas as pl
from jax.experimental.pallas import tpu as pltpu


def _flow_recon_kernel(flow_ref, base_ref, img_ref, seq_ref, out_ref, *,
                       H, W, contract_x):
    """One (batch, pixel-tile) grid step.

    flow_ref : [1, 2, TP]     predicted flow (x, y), output pixels on lanes
    base_ref : [2, TP]        pixel-space base sample coords (x - 0.5, y - 0.5)
    img_ref  : [1, C*S1, S2]  source image (bf16); S2 = MXU contraction axis
    seq_ref  : [1, C, TP]     target image for the same output pixels (f32)
    out_ref  : [1, 1, 1, TP]  per-pixel |l_seq - warp| summed over channels
    """
    flow = flow_ref[0].astype(jnp.float32)    # [2, TP]
    base = base_ref[...]                      # [2, TP] (f32)
    img = img_ref[0]                          # [C*S1, S2] (bf16)
    seq = seq_ref[0].astype(jnp.float32)      # [C, TP]

    C, TP = seq.shape

    # grid_sample sampling coordinate in pixel space (align_corners=False):
    #   i{x,y} = 0.5 * flow_{x,y} + (pixel_{x,y} - 0.5)
    ixy = flow * 0.5 + base                   # [2, TP]: row 0 = ix, row 1 = iy

    def tent(coord, n):
        # Bilinear "tent" weights over valid source indices 0..n-1; indices
        # outside the image never appear -> reproduces padding_mode='zeros'.
        idx = lax.broadcasted_iota(jnp.int32, (n, TP), 0).astype(jnp.float32)
        return jnp.maximum(0.0, 1.0 - jnp.abs(idx - coord))     # [n, TP]

    if contract_x:
        w1 = tent(ixy[0:1, :], W)             # [W, TP] — MXU contraction over x
        w2 = tent(ixy[1:2, :], H)             # [H, TP]
        S1 = H
    else:
        w1 = tent(ixy[1:2, :], H)             # [H, TP] — MXU contraction over y
        w2 = tent(ixy[0:1, :], W)             # [W, TP]
        S1 = W

    # Stage 1 (MXU): bf16 operands, f32 accumulation.
    #   [C*S1, S2] @ [S2, TP] -> [C*S1, TP]
    rowmix = jnp.dot(img, w1.astype(img.dtype),
                     preferred_element_type=jnp.float32)

    # Stage 2 (VPU): interpolate along the remaining spatial axis, per channel.
    warp = jnp.sum(rowmix.reshape(C, S1, TP) * w2[None, :, :], axis=1)  # [C, TP]

    # Lane-dense partial output: per-pixel L1, summed over channels.
    out_ref[0, 0] = jnp.sum(jnp.abs(seq - warp), axis=0, keepdims=True)  # [1, TP]


def _vmem_bytes(tile_p, C, S1, S2, img_itemsize):
    """Rough per-step VMEM estimate (double-buffered I/O + intermediates)."""
    img_blk = C * S1 * S2 * img_itemsize * 2            # image (double-buffered)
    io_blk = tile_p * (2 + 2 + C + 1) * 4 * 2           # flow + base + seq + out
    rowmix = C * S1 * tile_p * 4
    weights = (S1 + S2) * tile_p * 4 + S2 * tile_p * img_itemsize
    misc = (C + 4) * tile_p * 4                          # ixy / warp / diff temps
    return int(1.25 * (img_blk + io_blk + rowmix + weights + misc))


def _vmem_budget_bytes():
    """Generation-aware budget; falls back to the v5e 16 MiB scoped default."""
    try:
        info = pltpu.get_tpu_info()
        cap = getattr(info, "vmem_capacity_bytes", None)
        if cap:
            return min(int(0.4 * cap), 40 * 1024 * 1024)
    except Exception:
        pass
    return 16 * 1024 * 1024


def _pick_tile(HW, C, S1, S2, img_itemsize):
    budget = _vmem_budget_bytes()
    cands = [t for t in (4096, 2048, 1024, 512, 256, 128) if HW % t == 0]
    if not cands:
        return HW            # tiny / awkward images: a single (lane-padded) tile
    for t in cands:
        if _vmem_bytes(t, C, S1, S2, img_itemsize) <= budget:
            return t
    return cands[-1]


def flow_reconstruction_loss(flow, l_img, l_seq, *, tile_p=None):
    """flow: reshapeable to [B, H, W, 2]; l_img / l_seq: [B, C, H, W] (NCHW)."""
    B, C, H, W = l_img.shape
    HW = H * W

    # Contract the larger spatial axis on the MXU (lane occupancy / MXU depth).
    contract_x = W >= H
    S1, S2 = (H, W) if contract_x else (W, H)

    img_dtype = jnp.bfloat16
    img_itemsize = jnp.dtype(img_dtype).itemsize

    if tile_p is None:
        tile_p = _pick_tile(HW, C, S1, S2, img_itemsize)
    assert HW % tile_p == 0, "pixel tile must divide H*W"
    assert tile_p % 128 == 0 or tile_p == HW, "pixel tile must be lane-aligned"
    NT = HW // tile_p

    # Lane-dense layouts: the flattened pixel axis (HW) is last everywhere.
    flow_t = flow.reshape(B, HW, 2).transpose(0, 2, 1).astype(jnp.float32)  # [B, 2, HW]
    if contract_x:
        img_r = l_img.reshape(B, C * H, W).astype(img_dtype)                # [B, C*H, W]
    else:
        img_r = l_img.transpose(0, 1, 3, 2).reshape(B, C * W, H).astype(img_dtype)
    seq_r = l_seq.reshape(B, C, HW).astype(jnp.float32)                     # [B, C, HW]

    # Pixel-space base sampling coords (batch-invariant, hoisted out of the
    # kernel).  The module's grid  arange/dim*2-1  pushed through grid_sample's
    # align_corners=False unnormalization is exactly  pixel - 0.5.
    bx = jnp.tile(jnp.arange(W, dtype=jnp.float32), (H,)) - 0.5
    by = jnp.repeat(jnp.arange(H, dtype=jnp.float32), W) - 0.5
    base = jnp.stack([bx, by], axis=0)                                      # [2, HW]

    vmem_est = _vmem_bytes(tile_p, C, S1, S2, img_itemsize)
    vmem_limit = int(min(max(int(1.6 * vmem_est), 32 * 1024 * 1024),
                         56 * 1024 * 1024))

    cost = pl.CostEstimate(
        flops=int(2 * B * NT * C * S1 * (S2 + 1) * tile_p),
        transcendentals=0,
        bytes_accessed=int(B * C * HW * img_itemsize        # image (once per batch)
                           + B * HW * (2 + C + 1) * 4       # flow + seq + out
                           + NT * 2 * tile_p * 4),          # base grid
    )

    kernel = functools.partial(_flow_recon_kernel, H=H, W=W,
                               contract_x=contract_x)
    partials = pl.pallas_call(
        kernel,
        out_shape=jax.ShapeDtypeStruct((B, NT, 1, tile_p), jnp.float32),
        grid=(B, NT),
        in_specs=[
            pl.BlockSpec((1, 2, tile_p), lambda b, t: (b, 0, t)),
            pl.BlockSpec((2, tile_p), lambda b, t: (0, t)),
            pl.BlockSpec((1, C * S1, S2), lambda b, t: (b, 0, 0)),
            pl.BlockSpec((1, C, tile_p), lambda b, t: (b, 0, t)),
        ],
        out_specs=pl.BlockSpec((1, 1, 1, tile_p), lambda b, t: (b, t, 0, 0)),
        compiler_params=pltpu.CompilerParams(
            # On v7x the leading (batch) "parallel" axis shards across the two
            # TensorCores; on v5e/v6e this is a no-op.
            dimension_semantics=("parallel", "parallel"),
            vmem_limit_bytes=vmem_limit),
        cost_estimate=cost,
    )(flow_t, base, img_r, seq_r)

    return jnp.sum(partials) / float(W * H)


def flow_reconstruction_loss_ref(flow, l_img, l_seq):
    """Pure-JAX reference (gather-based grid_sample, align_corners=False, zeros pad)."""
    B, C, H, W = l_img.shape
    flow = flow.reshape(B, H, W, 2).astype(jnp.float32)
    base_x = (jnp.arange(W, dtype=jnp.float32) / W) * 2.0 - 1.0
    base_y = (jnp.arange(H, dtype=jnp.float32) / H) * 2.0 - 1.0
    gx = flow[..., 0] / W + base_x[None, None, :]
    gy = flow[..., 1] / H + base_y[None, :, None]
    ix = ((gx + 1.0) * W - 1.0) * 0.5
    iy = ((gy + 1.0) * H - 1.0) * 0.5
    x0f = jnp.floor(ix)
    y0f = jnp.floor(iy)
    wx1 = ix - x0f
    wx0 = 1.0 - wx1
    wy1 = iy - y0f
    wy0 = 1.0 - wy1
    x0 = x0f.astype(jnp.int32)
    y0 = y0f.astype(jnp.int32)
    x1 = x0 + 1
    y1 = y0 + 1

    def samp_b(img_b, yc, xc):
        valid = ((xc >= 0) & (xc < W) & (yc >= 0) & (yc < H)).astype(img_b.dtype)
        v = img_b[:, jnp.clip(yc, 0, H - 1), jnp.clip(xc, 0, W - 1)]
        return v * valid[None]

    samp = jax.vmap(samp_b)
    warped = (samp(l_img, y0, x0) * (wy0 * wx0)[:, None]
              + samp(l_img, y0, x1) * (wy0 * wx1)[:, None]
              + samp(l_img, y1, x0) * (wy1 * wx0)[:, None]
              + samp(l_img, y1, x1) * (wy1 * wx1)[:, None])
    return jnp.sum(jnp.abs(l_seq.astype(jnp.float32) - warped)) / (W * H)


if __name__ == "__main__":
    key = jax.random.PRNGKey(0)
    k1, k2, k3, k4, k5, k6 = jax.random.split(key, 6)

    # Case 1: wide image (MXU contracts over x).  Flow shaped like the module's
    # reshape(-1, H, W, 2) target, in pixel units.
    B, C, H, W = 2, 4, 16, 32
    flow = jax.random.uniform(k1, (B, H, W, 2), jnp.float32, minval=-3.0, maxval=3.0)
    l_img = jax.random.normal(k2, (B, C, H, W), jnp.float32)
    l_seq = jax.random.normal(k3, (B, C, H, W), jnp.float32)

    loss = jax.block_until_ready(flow_reconstruction_loss(flow, l_img, l_seq))
    loss_tiled = jax.block_until_ready(
        flow_reconstruction_loss(flow, l_img, l_seq, tile_p=128))
    loss_ref = jax.block_until_ready(flow_reconstruction_loss_ref(flow, l_img, l_seq))

    # bf16 MXU operands -> widened tolerance (accumulation stays f32).
    np.testing.assert_allclose(np.asarray(loss), np.asarray(loss_ref),
                               rtol=2e-2, atol=2e-2)
    np.testing.assert_allclose(np.asarray(loss_tiled), np.asarray(loss_ref),
                               rtol=2e-2, atol=2e-2)

    # Case 2: tall image (MXU contracts over y — exercises the swapped layout).
    B2, C2, H2, W2 = 1, 3, 32, 16
    flow2 = jax.random.uniform(k4, (B2, H2, W2, 2), jnp.float32, minval=-3.0, maxval=3.0)
    l_img2 = jax.random.normal(k5, (B2, C2, H2, W2), jnp.float32)
    l_seq2 = jax.random.normal(k6, (B2, C2, H2, W2), jnp.float32)

    loss2 = jax.block_until_ready(flow_reconstruction_loss(flow2, l_img2, l_seq2))
    loss2_ref = jax.block_until_ready(
        flow_reconstruction_loss_ref(flow2, l_img2, l_seq2))
    np.testing.assert_allclose(np.asarray(loss2), np.asarray(loss2_ref),
                               rtol=2e-2, atol=2e-2)

    print("KERNEL_OK")
</pallas_src>

<mosaic_0001>
module attributes {stable_mosaic.version = 11 : i64} {
  func.func @_flow_recon_kernel(%arg0: i32, %arg1: i32, %arg2: memref<1x2x512xf32, #tpu.memory_space<vmem>>, %arg3: memref<2x512xf32, #tpu.memory_space<vmem>>, %arg4: memref<1x64x32xbf16, #tpu.memory_space<vmem>>, %arg5: memref<1x4x512xf32, #tpu.memory_space<vmem>>, %arg6: memref<1x1x1x512xf32, #tpu.memory_space<vmem>>) attributes {dimension_semantics = [#tpu.dimension_semantics<parallel>, #tpu.dimension_semantics<parallel>], iteration_bounds = array<i64: 2, 1>, scalar_prefetch = 0 : i64, scratch_operands = 0 : i64, tpu.core_type = #tpu.core_type<tc>, window_params = [{transform_indices = @transform_0, window_bounds = array<i64: 1, 2, 512>}, {transform_indices = @transform_1, window_bounds = array<i64: 2, 512>}, {transform_indices = @transform_2, window_bounds = array<i64: 1, 64, 32>}, {transform_indices = @transform_3, window_bounds = array<i64: 1, 4, 512>}, {transform_indices = @transform_4, window_bounds = array<i64: 1, 1, 1, 512>}]} {
    %c0 = arith.constant 0 : index
    %c0_0 = arith.constant 0 : index
    %c0_1 = arith.constant 0 : index
    %0 = vector.load %arg2[%c0, %c0_0, %c0_1] : memref<1x2x512xf32, #tpu.memory_space<vmem>>, vector<1x2x512xf32>
    %1 = vector.shape_cast %0 : vector<1x2x512xf32> to vector<2x512xf32>
    %c0_2 = arith.constant 0 : index
    %c0_3 = arith.constant 0 : index
    %2 = vector.load %arg3[%c0_2, %c0_3] : memref<2x512xf32, #tpu.memory_space<vmem>>, vector<2x512xf32>
    %c0_4 = arith.constant 0 : index
    %c0_5 = arith.constant 0 : index
    %c0_6 = arith.constant 0 : index
    %3 = vector.load %arg4[%c0_4, %c0_5, %c0_6] : memref<1x64x32xbf16, #tpu.memory_space<vmem>>, vector<1x64x32xbf16>
    %4 = vector.shape_cast %3 : vector<1x64x32xbf16> to vector<64x32xbf16>
    %c0_7 = arith.constant 0 : index
    %c0_8 = arith.constant 0 : index
    %c0_9 = arith.constant 0 : index
    %5 = vector.load %arg5[%c0_7, %c0_8, %c0_9] : memref<1x4x512xf32, #tpu.memory_space<vmem>>, vector<1x4x512xf32>
    %6 = vector.shape_cast %5 : vector<1x4x512xf32> to vector<4x512xf32>
    %cst = arith.constant 5.000000e-01 : f32
    %7 = vector.broadcast %cst : f32 to vector<2x512xf32>
    %8 = arith.mulf %1, %7 : vector<2x512xf32>
    %9 = arith.addf %8, %2 : vector<2x512xf32>
    %10 = vector.extract_strided_slice %9 {offsets = [0, 0], sizes = [1, 512], strides = [1, 1]} : vector<2x512xf32> to vector<1x512xf32>
    %11 = tpu.iota {dimensions = array<i32: 0>} : vector<32x512xi32>
    %12 = arith.sitofp %11 : vector<32x512xi32> to vector<32x512xf32>
    %13 = vector.broadcast %10 : vector<1x512xf32> to vector<32x512xf32>
    %14 = arith.subf %12, %13 : vector<32x512xf32>
    %15 = math.absf %14 : vector<32x512xf32>
    %cst_10 = arith.constant 1.000000e+00 : f32
    %16 = vector.broadcast %cst_10 : f32 to vector<32x512xf32>
    %17 = arith.subf %16, %15 : vector<32x512xf32>
    %cst_11 = arith.constant 0.000000e+00 : f32
    %18 = vector.broadcast %cst_11 : f32 to vector<32x512xf32>
    %19 = arith.maximumf %18, %17 : vector<32x512xf32>
    %20 = vector.extract_strided_slice %9 {offsets = [1, 0], sizes = [1, 512], strides = [1, 1]} : vector<2x512xf32> to vector<1x512xf32>
    %21 = tpu.iota {dimensions = array<i32: 0>} : vector<16x512xi32>
    %22 = arith.sitofp %21 : vector<16x512xi32> to vector<16x512xf32>
    %23 = vector.broadcast %20 : vector<1x512xf32> to vector<16x512xf32>
    %24 = arith.subf %22, %23 : vector<16x512xf32>
    %25 = math.absf %24 : vector<16x512xf32>
    %cst_12 = arith.constant 1.000000e+00 : f32
    %26 = vector.broadcast %cst_12 : f32 to vector<16x512xf32>
    %27 = arith.subf %26, %25 : vector<16x512xf32>
    %cst_13 = arith.constant 0.000000e+00 : f32
    %28 = vector.broadcast %cst_13 : f32 to vector<16x512xf32>
    %29 = arith.maximumf %28, %27 : vector<16x512xf32>
    %30 = arith.truncf %19 : vector<32x512xf32> to vector<32x512xbf16>
    %cst_14 = arith.constant dense<0.000000e+00> : vector<64x512xf32>
    %31 = tpu.matmul %4, %30, %cst_14 {dimension_numbers = #tpu.dot_dimension_numbers<[1], [0], [0], [1], [0, 0, 1, 1], [], []>} : vector<64x32xbf16>, vector<32x512xbf16>, vector<64x512xf32> -> vector<64x512xf32>
    %32 = vector.shape_cast %31 : vector<64x512xf32> to vector<4x16x512xf32>
    %33 = vector.shape_cast %29 : vector<16x512xf32> to vector<1x16x512xf32>
    %34 = vector.broadcast %33 : vector<1x16x512xf32> to vector<4x16x512xf32>
    %35 = arith.mulf %32, %34 : vector<4x16x512xf32>
    %cst_15 = arith.constant dense<0.000000e+00> : vector<4x512xf32>
    %36 = vector.multi_reduction <add>, %35, %cst_15 [1] : vector<4x16x512xf32> to vector<4x512xf32>
    %37 = arith.subf %6, %36 : vector<4x512xf32>
    %38 = math.absf %37 : vector<4x512xf32>
    %cst_16 = arith.constant dense<0.000000e+00> : vector<512xf32>
    %39 = vector.multi_reduction <add>, %38, %cst_16 [0] : vector<4x512xf32> to vector<512xf32>
    %40 = vector.shape_cast %39 : vector<512xf32> to vector<1x512xf32>
    %c0_17 = arith.constant 0 : index
    %c0_18 = arith.constant 0 : index
    %c0_19 = arith.constant 0 : index
    %c0_20 = arith.constant 0 : index
    %41 = vector.load %arg6[%c0_17, %c0_18, %c0_19, %c0_20] : memref<1x1x1x512xf32, #tpu.memory_space<vmem>>, vector<1x1x1x512xf32>
    %42 = vector.shape_cast %41 : vector<1x1x1x512xf32> to vector<1x512xf32>
    %43 = vector.shape_cast %40 : vector<1x512xf32> to vector<1x1x1x512xf32>
    tpu.vector_store %arg6[%c0_17, %c0_18, %c0_19, %c0_20], %43 {strides = array<i32>} : memref<1x1x1x512xf32, #tpu.memory_space<vmem>>, vector<1x1x1x512xf32>,
    return
  }
  func.func @transform_0(%arg0: i32, %arg1: i32) -> (i32, i32, i32) {
    %c0_i32 = arith.constant 0 : i32
    %c0_i32_0 = arith.constant 0 : i32
    return %arg0, %c0_i32, %arg1 : i32, i32, i32
  }
  func.func @transform_1(%arg0: i32, %arg1: i32) -> (i32, i32) {
    %c0_i32 = arith.constant 0 : i32
    %c0_i32_0 = arith.constant 0 : i32
    return %c0_i32, %arg1 : i32, i32
  }
  func.func @transform_2(%arg0: i32, %arg1: i32) -> (i32, i32, i32) {
    %c0_i32 = arith.constant 0 : i32
    %c0_i32_0 = arith.constant 0 : i32
    %c0_i32_1 = arith.constant 0 : i32
    return %arg0, %c0_i32, %c0_i32_0 : i32, i32, i32
  }
  func.func @transform_3(%arg0: i32, %arg1: i32) -> (i32, i32, i32) {
    %c0_i32 = arith.constant 0 : i32
    %c0_i32_0 = arith.constant 0 : i32
    return %arg0, %c0_i32, %arg1 : i32, i32, i32
  }
  func.func @transform_4(%arg0: i32, %arg1: i32) -> (i32, i32, i32, i32) {
    %c0_i32 = arith.constant 0 : i32
    %c0_i32_0 = arith.constant 0 : i32
    %c0_i32_1 = arith.constant 0 : i32
    return %arg0, %arg1, %c0_i32, %c0_i32_0 : i32, i32, i32, i32
  }
}

</mosaic_0001>

<llo_original>
// kernel: tpu_custom_call.1
$region0: #{tpu_custom_call.1}
  #allocation0 [shape = 'u32[]', space=smem, size = 0x4, offset = 0x4, fixed_abs, tag = 'smem constant byte address 0x4 - core index']
  #allocation1 [shape = 'u32[144,128]{1,0:T(1,128)}', space=vmem, size = 0x12000, scoped, tag = 'internal scratch']
  %s0 = inlined_call_operand.vmem [shape: f32[2,2,512], index: 0, kind: input, shape index: {}]
  %s1 = inlined_call_operand.vmem [shape: f32[2,512], index: 1, kind: input, shape index: {}]
  %s2 = inlined_call_operand.vmem [shape: bf16[2,64,32], index: 2, kind: input, shape index: {}]
  %s3 = inlined_call_operand.vmem [shape: f32[2,4,512], index: 3, kind: input, shape index: {}]
  %s4 = inlined_call_operand.hbm [shape: f32[2,1,1,512], index: 4, kind: output, shape index: {}]
  %s5 = sld [smem:[#allocation0]]
  $region49: #{tpu_custom_call.1} parent=0
    _
  %s7 = ssub.s32 1, %s5
  %s8 = scalar_select 0, %s7, %s5
  $region1: #{tpu_custom_call.1} parent=0
    #allocation2 [shape = 'u8[4096]{0}', space=vmem, size = 0x1000, scoped, tag = 'output window, operand 0']
    #allocation3 [shape = 's32[2]{0}', space=sflag, size = 0x8, scoped, tag = 'scoped memory for tpu_custom_call.1']
    %9 = vsyncpa [#allocation3], 0
    %s10 = scalar_lea.sflag [#allocation3], 1
    %11 = vsyncpa %s10, 0
    loop: start=0, step=1, limit=4
    $region2: #{tpu_custom_call.1} parent=1 // loop_pre_header
      _
    $region3: #{tpu_custom_call.1} parent=1 // loop_header
      %s13 = sphi 0, %s17
      %p14 = scmp.ge.s32.totalorder %s13, 4
      %s20 = sphi 0, %s32
      %s21 = sphi 0, %s28
      %s22 = sphi 0, %s20
      %s23 = sphi 0, %s21
      %s24 = sphi 0, %s22
      %s25 = sphi 0, %s23
      %s37 = sphi 0, %s39
      %s40 = sphi 0, %s37
      %s41 = sphi 0, %s40
      %s57 = sphi 0, %s41
      %s63 = sphi 0, %s65
      %s66 = sphi 0, %s63
      %s67 = sphi 0, %s66
      %s83 = sphi 0, %s67
      %s89 = sphi 0, %s91
      %s92 = sphi 0, %s89
      %s93 = sphi 0, %s92
      %s109 = sphi 0, %s93
      %s117 = sphi 0, %s119
      %s120 = sphi 0, %s117
      %s121 = sphi 0, %s120
      %s137 = sphi 0, %s121
      %s145 = sphi 0, %s147
      %s148 = sphi 0, %s145
      %s149 = sphi 0, %s148
      %s165 = sphi 0, %s149
    $region4: #{tpu_custom_call.1} parent=1 // loop_header_branch
      %16 = sbr.rel (%p14) target = $region8
    $region5: #{tpu_custom_call.1} parent=1 // loop_body
      %s18 = ssub.s32 %s13, 1
      %s19 = ssub.s32 %s13, 2
      %s26 = sadd.s32 1, %s21
      %p27 = scmp.ge.s32.totalorder %s26, 1
      %s28 = scalar_select %p27, 0, %s26
      %s29 = sadd.s32 1, %s20
      %s30 = scalar_select %p27, %s29, %s20
      %p31 = scmp.ge.s32.totalorder %s30, 2
      %s32 = scalar_select %p31, 0, %s30
      %s33 = ssub.s32 %s20, %s32
      %s34 = ssub.s32 %s21, %s28
      %s35 = sor.u32 %s33, %s34
      %p36 = scmp.eq.s32.totalorder %s35, 0
      %s38 = sadd.s32 %s37, 1
      %s39 = scalar_select %p36, %s37, %s38
      %p42 = pneg %p36
      %p43 = scmp.eq.s32.totalorder %s13, 1
      %p44 = por %p42, %p43
      %p45 = scmp.ne.s32.totalorder %s37, %s40
      %p46 = scmp.eq.s32.totalorder %s13, 0
      %p47 = por %p45, %p46
      %p48 = scmp.ne.s32.totalorder %s37, %s40
      %p49 = scmp.eq.s32.totalorder %s18, 1
      %p50 = por %p48, %p49
      %p51 = scmp.ne.s32.totalorder %s40, %s41
      %p52 = scmp.eq.s32.totalorder %s18, 0
      %p53 = por %p51, %p52
      %p54 = scmp.ne.s32.totalorder %s40, %s41
      %p55 = scmp.eq.s32.totalorder %s19, 1
      %p56 = por %p54, %p55
      %p58 = scmp.ne.s32.totalorder %s41, %s57
      %p59 = scmp.eq.s32.totalorder %s19, 0
      %p60 = por %p58, %p59
      %s61 = ssub.s32 %s21, %s28
      %p62 = scmp.eq.s32.totalorder %s61, 0
      %s64 = sadd.s32 %s63, 1
      %s65 = scalar_select %p62, %s63, %s64
      %p68 = pneg %p62
      %p69 = scmp.eq.s32.totalorder %s13, 1
      %p70 = por %p68, %p69
      %p71 = scmp.ne.s32.totalorder %s63, %s66
      %p72 = scmp.eq.s32.totalorder %s13, 0
      %p73 = por %p71, %p72
      %p74 = scmp.ne.s32.totalorder %s63, %s66
      %p75 = scmp.eq.s32.totalorder %s18, 1
      %p76 = por %p74, %p75
      %p77 = scmp.ne.s32.totalorder %s66, %s67
      %p78 = scmp.eq.s32.totalorder %s18, 0
      %p79 = por %p77, %p78
      %p80 = scmp.ne.s32.totalorder %s66, %s67
      %p81 = scmp.eq.s32.totalorder %s19, 1
      %p82 = por %p80, %p81
      %p84 = scmp.ne.s32.totalorder %s67, %s83
      %p85 = scmp.eq.s32.totalorder %s19, 0
      %p86 = por %p84, %p85
      %s87 = ssub.s32 %s20, %s32
      %p88 = scmp.eq.s32.totalorder %s87, 0
      %s90 = sadd.s32 %s89, 1
      %s91 = scalar_select %p88, %s89, %s90
      %p94 = pneg %p88
      %p95 = scmp.eq.s32.totalorder %s13, 1
      %p96 = por %p94, %p95
      %p97 = scmp.ne.s32.totalorder %s89, %s92
      %p98 = scmp.eq.s32.totalorder %s13, 0
      %p99 = por %p97, %p98
      %p100 = scmp.ne.s32.totalorder %s89, %s92
      %p101 = scmp.eq.s32.totalorder %s18, 1
      %p102 = por %p100, %p101
      %p103 = scmp.ne.s32.totalorder %s92, %s93
      %p104 = scmp.eq.s32.totalorder %s18, 0
      %p105 = por %p103, %p104
      %p106 = scmp.ne.s32.totalorder %s92, %s93
      %p107 = scmp.eq.s32.totalorder %s19, 1
      %p108 = por %p106, %p107
      %p110 = scmp.ne.s32.totalorder %s93, %s109
      %p111 = scmp.eq.s32.totalorder %s19, 0
      %p112 = por %p110, %p111
      %s113 = ssub.s32 %s20, %s32
      %s114 = ssub.s32 %s21, %s28
      %s115 = sor.u32 %s113, %s114
      %p116 = scmp.eq.s32.totalorder %s115, 0
      %s118 = sadd.s32 %s117, 1
      %s119 = scalar_select %p116, %s117, %s118
      %p122 = pneg %p116
      %p123 = scmp.eq.s32.totalorder %s13, 1
      %p124 = por %p122, %p123
      %p125 = scmp.ne.s32.totalorder %s117, %s120
      %p126 = scmp.eq.s32.totalorder %s13, 0
      %p127 = por %p125, %p126
      %p128 = scmp.ne.s32.totalorder %s117, %s120
      %p129 = scmp.eq.s32.totalorder %s18, 1
      %p130 = por %p128, %p129
      %p131 = scmp.ne.s32.totalorder %s120, %s121
      %p132 = scmp.eq.s32.totalorder %s18, 0
      %p133 = por %p131, %p132
      %p134 = scmp.ne.s32.totalorder %s120, %s121
      %p135 = scmp.eq.s32.totalorder %s19, 1
      %p136 = por %p134, %p135
      %p138 = scmp.ne.s32.totalorder %s121, %s137
      %p139 = scmp.eq.s32.totalorder %s19, 0
      %p140 = por %p138, %p139
      %s141 = ssub.s32 %s20, %s32
      %s142 = ssub.s32 %s21, %s28
      %s143 = sor.u32 %s141, %s142
      %p144 = scmp.eq.s32.totalorder %s143, 0
      %s146 = sadd.s32 %s145, 1
      %s147 = scalar_select %p144, %s145, %s146
      %p150 = pneg %p144
      %p151 = scmp.eq.s32.totalorder %s13, 1
      %p152 = por %p150, %p151
      %p153 = scmp.ne.s32.totalorder %s145, %s148
      %p154 = scmp.eq.s32.totalorder %s13, 0
      %p155 = por %p153, %p154
      %p156 = scmp.ne.s32.totalorder %s145, %s148
      %p157 = scmp.eq.s32.totalorder %s18, 1
      %p158 = por %p156, %p157
      %p159 = scmp.ne.s32.totalorder %s148, %s149
      %p160 = scmp.eq.s32.totalorder %s18, 0
      %p161 = por %p159, %p160
      %p162 = scmp.ne.s32.totalorder %s148, %s149
      %p163 = scmp.eq.s32.totalorder %s19, 1
      %p164 = por %p162, %p163
      %p166 = scmp.ne.s32.totalorder %s149, %s165
      %p167 = scmp.eq.s32.totalorder %s19, 0
      %p168 = por %p166, %p167
      %p169 = scmp.le.s32.totalorder 1, %s13
      %p170 = scmp.lt.s32.totalorder %s13, 3
      %p171 = pnand %p169, %p170
      %p172 = pneg %p171
      // Predicated region
      $region9: #{tpu_custom_call.1} parent=5 // pred_check
        _
      $region10: #{tpu_custom_call.1} parent=5 // pred_check_branch
        %174 = sbr.rel (%p171) target = $region12
      $region11: #{tpu_custom_call.1} parent=5 // pred_region
        %s175 = ssub.s32 %s13, 1
        // Predicated region
        $region13: #{tpu_custom_call.1} parent=11 // pred_check
          %p176 = pneg %p79
        $region14: #{tpu_custom_call.1} parent=11 // pred_check_branch
          %178 = sbr.rel (%p176) target = $region16
        $region15: #{tpu_custom_call.1} parent=11 // pred_region
          %s179 = smul.u32 4, %s23
          %p180 = scmp.lt.s32.totalorder %s179, 3
          %s181 = scalar_select %p180, %s179, 3
          %s182 = smul.addr %s181, 2
          %s183 = scalar_lea.vmem %s1, %s182
          %s184 = smul.u32 4, %s23
        $region16: #{tpu_custom_call.1} parent=11 // pred_fallthru
          _
      $region12: #{tpu_custom_call.1} parent=5 // pred_fallthru
        _
      %p185 = scmp.lt.s32.totalorder %s13, 2
      // Predicated region
      $region17: #{tpu_custom_call.1} parent=5 // pred_check
        %p186 = pneg %p185
      $region18: #{tpu_custom_call.1} parent=5 // pred_check_branch
        %188 = sbr.rel (%p186) target = $region20
      $region19: #{tpu_custom_call.1} parent=5 // pred_region
        // Predicated region
        $region21: #{tpu_custom_call.1} parent=19 // pred_check
          %p189 = pneg %p47
        $region22: #{tpu_custom_call.1} parent=19 // pred_check_branch
          %191 = sbr.rel (%p189) target = $region24
        $region23: #{tpu_custom_call.1} parent=19 // pred_region
          %s192 = smul.u32 4, %s21
          %p193 = scmp.lt.s32.totalorder %s20, 1
          %s194 = scalar_select %p193, %s20, 1
          %p195 = scmp.lt.s32.totalorder %s192, 3
          %s196 = scalar_select %p195, %s192, 3
          %s197 = smul.addr %s194, 4
          %s198 = sadd.s32 %s196, %s197
          %s199 = smul.addr %s198, 2
          %s200 = scalar_lea.vmem %s0, %s199
          %s201 = smul.u32 4, %s21
        $region24: #{tpu_custom_call.1} parent=19 // pred_fallthru
          _
        // Predicated region
        $region25: #{tpu_custom_call.1} parent=19 // pred_check
          %p202 = pneg %p99
        $region26: #{tpu_custom_call.1} parent=19 // pred_check_branch
          %204 = sbr.rel (%p202) target = $region28
        $region27: #{tpu_custom_call.1} parent=19 // pred_region
          %p205 = scmp.lt.s32.totalorder %s20, 1
          %s206 = scalar_select %p205, %s20, 1
          %s207 = smul.addr %s206, 8
          %s208 = smul.addr %s207, 4
          %s209 = scalar_lea.vmem %s2, %s208
        $region28: #{tpu_custom_call.1} parent=19 // pred_fallthru
          _
        // Predicated region
        $region29: #{tpu_custom_call.1} parent=19 // pred_check
          %p210 = pneg %p127
        $region30: #{tpu_custom_call.1} parent=19 // pred_check_branch
          %212 = sbr.rel (%p210) target = $region32
        $region31: #{tpu_custom_call.1} parent=19 // pred_region
          %s213 = smul.u32 4, %s21
          %p214 = scmp.lt.s32.totalorder %s20, 1
          %s215 = scalar_select %p214, %s20, 1
          %p216 = scmp.lt.s32.totalorder %s213, 3
          %s217 = scalar_select %p216, %s213, 3
          %s218 = smul.addr %s215, 4
          %s219 = sadd.s32 %s217, %s218
          %s220 = smul.addr %s219, 4
          %s221 = scalar_lea.vmem %s3, %s220
          %s222 = smul.u32 4, %s21
        $region32: #{tpu_custom_call.1} parent=19 // pred_fallthru
          _
      $region20: #{tpu_custom_call.1} parent=5 // pred_fallthru
        _
      %p223 = scmp.le.s32.totalorder 1, %s13
      %p224 = scmp.lt.s32.totalorder %s13, 3
      %p225 = pnand %p223, %p224
      %p226 = pneg %p225
      // Predicated region
      $region33: #{tpu_custom_call.1} parent=5 // pred_check
        _
      $region34: #{tpu_custom_call.1} parent=5 // pred_check_branch
        %228 = sbr.rel (%p225) target = $region36
      $region35: #{tpu_custom_call.1} parent=5 // pred_region
        %s229 = ssub.s32 %s13, 1
        %s230 = smul.u32 4, %s23
        %p231 = scmp.lt.s32.totalorder %s22, 1
        %s232 = scalar_select %p231, %s22, 1
        %p233 = scmp.lt.s32.totalorder %s230, 3
        %s234 = scalar_select %p233, %s230, 3
        %s235 = smul.addr %s232, 4
        %s236 = sadd.s32 %s234, %s235
        %s237 = smul.addr %s236, 2
        %s238 = scalar_lea.vmem %s0, %s237
        %p239 = pneg %p53
        %p240 = pneg %p50
        %s241 = smul.u32 4, %s23
        %p242 = scmp.lt.s32.totalorder %s241, 3
        %s243 = scalar_select %p242, %s241, 3
        %s244 = smul.addr %s243, 2
        %s245 = scalar_lea.vmem %s1, %s244
        %p246 = pneg %p79
        %p247 = pneg %p76
        %p248 = scmp.lt.s32.totalorder %s22, 1
        %s249 = scalar_select %p248, %s22, 1
        %s250 = smul.addr %s249, 8
        %s251 = smul.addr %s250, 4
        %s252 = scalar_lea.vmem %s2, %s251
        %p253 = pneg %p105
        %p254 = pneg %p102
        %s255 = smul.u32 4, %s23
        %p256 = scmp.lt.s32.totalorder %s22, 1
        %s257 = scalar_select %p256, %s22, 1
        %p258 = scmp.lt.s32.totalorder %s255, 3
        %s259 = scalar_select %p258, %s255, 3
        %s260 = smul.addr %s257, 4
        %s261 = sadd.s32 %s259, %s260
        %s262 = smul.addr %s261, 4
        %s263 = scalar_lea.vmem %s3, %s262
        %p264 = pneg %p133
        %p265 = pneg %p130
        %p266 = pneg %p161
        %p267 = pneg %p158
        %s268 = sand.u32 %s148, 1
        %s269 = scalar_lea.sflag [#allocation3], %s268
        %s270 = sand.u32 %s148, 1
        %s271 = smul.addr %s270, 4
        %s272 = scalar_lea.vmem [#allocation2], %s271
        %s273 = smul.u32 4, %s23
        %p274 = scmp.lt.s32.totalorder %s22, 1
        %s275 = scalar_select %p274, %s22, 1
        %p276 = scmp.lt.s32.totalorder %s273, 3
        %s277 = scalar_select %p276, %s273, 3
        %s278 = smul.addr %s275, 4
        %s279 = sadd.s32 %s277, %s278
        %s280 = smul.addr %s279, 2
        %s281 = scalar_lea.vmem %s0, %s280
        %s282 = smul.u32 4, %s23
        %s283 = smul.u32 4, %s23
        %p284 = scmp.lt.s32.totalorder %s283, 3
        %s285 = scalar_select %p284, %s283, 3
        %s286 = smul.addr %s285, 2
        %s287 = scalar_lea.vmem %s1, %s286
        %s288 = smul.u32 4, %s23
        %p289 = scmp.lt.s32.totalorder %s22, 1
        %s290 = scalar_select %p289, %s22, 1
        %s291 = smul.addr %s290, 8
        %s292 = smul.addr %s291, 4
        %s293 = scalar_lea.vmem %s2, %s292
        %s294 = smul.u32 4, %s23
        %p295 = scmp.lt.s32.totalorder %s22, 1
        %s296 = scalar_select %p295, %s22, 1
        %p297 = scmp.lt.s32.totalorder %s294, 3
        %s298 = scalar_select %p297, %s294, 3
        %s299 = smul.addr %s296, 4
        %s300 = sadd.s32 %s298, %s299
        %s301 = smul.addr %s300, 4
        %s302 = scalar_lea.vmem %s3, %s301
        %s303 = smul.u32 4, %s23
        %v305 = vld [vmem:[%s281] sm:$0xff]
        %v306 = vld [vmem:[%s287] sm:$0xff]
        %v307 = vld [vmem:[%s293] sm:$0xf]
        %v308 = vld [vmem:[%s293 + $0x4] sm:$0xf]
        %v309 = vld [vmem:[%s293 + $0x8] sm:$0xf]
        %v310 = vld [vmem:[%s293 + $0xc] sm:$0xf]
        %v311 = vld [vmem:[%s293 + $0x10] sm:$0xf]
        %v312 = vld [vmem:[%s293 + $0x14] sm:$0xf]
        %v313 = vld [vmem:[%s293 + $0x18] sm:$0xf]
        %v314 = vld [vmem:[%s293 + $0x1c] sm:$0xf]
        %v315 = vld [vmem:[%s302] sm:$0xff]
        %v316 = vld [vmem:[%s302 + $0x8] sm:$0xff]
        %v317 = vmul.f32 %v305, 0.5
        %v318 = vadd.f32 %v317, %v306
        %v319 = vlaneseq
        %v320 = vshrl.u32 %v319, 7
        %v321 = vadd.s32 %v320, 8
        %v322 = vadd.s32 %v320, 16
        %v323 = vadd.s32 %v320, 24
        %v324 = vcvt.s32.f32 %v320
        %v325 = vcvt.s32.f32 %v321
        %v326 = vcvt.s32.f32 %v322
        %v327 = vcvt.s32.f32 %v323
        %v329 = vlaneseq
        %v330 = vshrl.u32 %v329, 7
        %v331 = vsub.s32 0, %v330
        %v332 = vrot.slane %v318, %v331
        %v333 = vlaneseq
        %v334 = vshrl.u32 %v333, 7
        %v335 = vsub.s32 2, %v334
        %v336 = vrot.slane %v318, %v335
        %v337 = vlaneseq
        %v338 = vshrl.u32 %v337, 7
        %v339 = vsub.s32 4, %v338
        %v340 = vrot.slane %v318, %v339
        %v341 = vlaneseq
        %v342 = vshrl.u32 %v341, 7
        %v343 = vsub.s32 6, %v342
        %v344 = vrot.slane %v318, %v343
        %v349 = vlaneseq
        %v350 = vshrl.u32 %v349, 7
        %v351 = vsub.s32 0, %v350
        %v352 = vrot.slane %v332, %v351
        %v353 = vlaneseq
        %v354 = vshrl.u32 %v353, 7
        %v355 = vsub.s32 0, %v354
        %v356 = vrot.slane %v336, %v355
        %v357 = vlaneseq
        %v358 = vshrl.u32 %v357, 7
        %v359 = vsub.s32 0, %v358
        %v360 = vrot.slane %v340, %v359
        %v361 = vlaneseq
        %v362 = vshrl.u32 %v361, 7
        %v363 = vsub.s32 0, %v362
        %v364 = vrot.slane %v344, %v363
        %v365 = vsub.f32 %v324, %v352
        %v366 = vsub.f32 %v324, %v356
        %v367 = vsub.f32 %v324, %v360
        %v368 = vsub.f32 %v324, %v364
        %v369 = vsub.f32 %v325, %v352
        %v370 = vsub.f32 %v325, %v356
        %v371 = vsub.f32 %v325, %v360
        %v372 = vsub.f32 %v325, %v364
        %v373 = vsub.f32 %v326, %v352
        %v374 = vsub.f32 %v326, %v356
        %v375 = vsub.f32 %v326, %v360
        %v376 = vsub.f32 %v326, %v364
        %v377 = vsub.f32 %v327, %v352
        %v378 = vsub.f32 %v327, %v356
        %v379 = vsub.f32 %v327, %v360
        %v380 = vsub.f32 %v327, %v364
        %v381 = vand.u32 2147483647, %v365
        %v382 = vand.u32 2147483647, %v366
        %v383 = vand.u32 2147483647, %v367
        %v384 = vand.u32 2147483647, %v368
        %v385 = vand.u32 2147483647, %v369
        %v386 = vand.u32 2147483647, %v370
        %v387 = vand.u32 2147483647, %v371
        %v388 = vand.u32 2147483647, %v372
        %v389 = vand.u32 2147483647, %v373
        %v390 = vand.u32 2147483647, %v374
        %v391 = vand.u32 2147483647, %v375
        %v392 = vand.u32 2147483647, %v376
        %v393 = vand.u32 2147483647, %v377
        %v394 = vand.u32 2147483647, %v378
        %v395 = vand.u32 2147483647, %v379
        %v396 = vand.u32 2147483647, %v380
        %v397 = vsub.f32 1.0, %v381
        %v398 = vsub.f32 1.0, %v382
        %v399 = vsub.f32 1.0, %v383
        %v400 = vsub.f32 1.0, %v384
        %v401 = vsub.f32 1.0, %v385
        %v402 = vsub.f32 1.0, %v386
        %v403 = vsub.f32 1.0, %v387
        %v404 = vsub.f32 1.0, %v388
        %v405 = vsub.f32 1.0, %v389
        %v406 = vsub.f32 1.0, %v390
        %v407 = vsub.f32 1.0, %v391
        %v408 = vsub.f32 1.0, %v392
        %v409 = vsub.f32 1.0, %v393
        %v410 = vsub.f32 1.0, %v394
        %v411 = vsub.f32 1.0, %v395
        %v412 = vsub.f32 1.0, %v396
        %v413 = vmax.f32 %v397, 0.0
        %v414 = vmax.f32 %v398, 0.0
        %v415 = vmax.f32 %v399, 0.0
        %v416 = vmax.f32 %v400, 0.0
        %v417 = vmax.f32 %v401, 0.0
        %v418 = vmax.f32 %v402, 0.0
        %v419 = vmax.f32 %v403, 0.0
        %v420 = vmax.f32 %v404, 0.0
        %v421 = vmax.f32 %v405, 0.0
        %v422 = vmax.f32 %v406, 0.0
        %v423 = vmax.f32 %v407, 0.0
        %v424 = vmax.f32 %v408, 0.0
        %v425 = vmax.f32 %v409, 0.0
        %v426 = vmax.f32 %v410, 0.0
        %v427 = vmax.f32 %v411, 0.0
        %v428 = vmax.f32 %v412, 0.0
        %v429 = vlaneseq
        %v430 = vshrl.u32 %v429, 7
        %v431 = vsub.s32 1, %v430
        %v432 = vrot.slane %v318, %v431
        %v433 = vlaneseq
        %v434 = vshrl.u32 %v433, 7
        %v435 = vsub.s32 3, %v434
        %v436 = vrot.slane %v318, %v435
        %v437 = vlaneseq
        %v438 = vshrl.u32 %v437, 7
        %v439 = vsub.s32 5, %v438
        %v440 = vrot.slane %v318, %v439
        %v441 = vlaneseq
        %v442 = vshrl.u32 %v441, 7
        %v443 = vsub.s32 7, %v442
        %v444 = vrot.slane %v318, %v443
        %v449 = vlaneseq
        %v450 = vshrl.u32 %v449, 7
        %v451 = vsub.s32 1, %v450
        %v452 = vrot.slane %v432, %v451
        %v453 = vlaneseq
        %v454 = vshrl.u32 %v453, 7
        %v455 = vsub.s32 1, %v454
        %v456 = vrot.slane %v436, %v455
        %v457 = vlaneseq
        %v458 = vshrl.u32 %v457, 7
        %v459 = vsub.s32 1, %v458
        %v460 = vrot.slane %v440, %v459
        %v461 = vlaneseq
        %v462 = vshrl.u32 %v461, 7
        %v463 = vsub.s32 1, %v462
        %v464 = vrot.slane %v444, %v463
        %v465 = vsub.f32 %v324, %v452
        %v466 = vsub.f32 %v324, %v456
        %v467 = vsub.f32 %v324, %v460
        %v468 = vsub.f32 %v324, %v464
        %v469 = vsub.f32 %v325, %v452
        %v470 = vsub.f32 %v325, %v456
        %v471 = vsub.f32 %v325, %v460
        %v472 = vsub.f32 %v325, %v464
        %v473 = vand.u32 2147483647, %v465
        %v474 = vand.u32 2147483647, %v466
        %v475 = vand.u32 2147483647, %v467
        %v476 = vand.u32 2147483647, %v468
        %v477 = vand.u32 2147483647, %v469
        %v478 = vand.u32 2147483647, %v470
        %v479 = vand.u32 2147483647, %v471
        %v480 = vand.u32 2147483647, %v472
        %v481 = vsub.f32 1.0, %v473
        %v482 = vsub.f32 1.0, %v474
        %v483 = vsub.f32 1.0, %v475
        %v484 = vsub.f32 1.0, %v476
        %v485 = vsub.f32 1.0, %v477
        %v486 = vsub.f32 1.0, %v478
        %v487 = vsub.f32 1.0, %v479
        %v488 = vsub.f32 1.0, %v480
        %v489 = vmax.f32 %v481, 0.0
        %v490 = vmax.f32 %v482, 0.0
        %v491 = vmax.f32 %v483, 0.0
        %v492 = vmax.f32 %v484, 0.0
        %v493 = vmax.f32 %v485, 0.0
        %v494 = vmax.f32 %v486, 0.0
        %v495 = vmax.f32 %v487, 0.0
        %v496 = vmax.f32 %v488, 0.0
        %v497 = vpack.c.bf16 %v417, %v413
        %v498 = vpack.c.bf16 %v418, %v414
        %v499 = vpack.c.bf16 %v419, %v415
        %v500 = vpack.c.bf16 %v420, %v416
        %v501 = vpack.c.bf16 %v425, %v421
        %v502 = vpack.c.bf16 %v426, %v422
        %v503 = vpack.c.bf16 %v427, %v423
        %v504 = vpack.c.bf16 %v428, %v424
        %v513 = vunpack.c.l.b16 %v307
        %v514 = vunpack.c.l.b16 %v308
        %v515 = vunpack.c.l.b16 %v309
        %v516 = vunpack.c.l.b16 %v310
        %v517 = vunpack.c.l.b16 %v311
        %v518 = vunpack.c.l.b16 %v312
        %v519 = vunpack.c.l.b16 %v313
        %v520 = vunpack.c.l.b16 %v314
        %v521 = vpack.c.b16 %v514, %v513
        %v522 = vpack.c.b16 %v516, %v515
        %v523 = vpack.c.b16 %v518, %v517
        %v524 = vpack.c.b16 %v520, %v519
        %vm525 = vcmask 261120
        %v527 = vsel %vm525, %v521, 0
        %v530 = vsel %vm525, %v522, 0
        %v533 = vsel %vm525, %v523, 0
        %v536 = vsel %vm525, %v524, 0
        %538 = vmatprep.subr.bf16.mxu0 %v498
        %539 = vmatpush1.bf16.msra.mxu0 %v497
        %540 = vmatprep.subr.bf16.mxu0 %v502
        %541 = vmatpush1.bf16.msra.mxu0 %v501
        %542 = vmatprep.subr.bf16.mxu0 0
        %543 = vmatpush1.bf16.msra.mxu0 0
        %544 = vmatprep.subr.bf16.mxu0 0
        %545 = vmatpush1.bf16.msra.mxu0 0
        %546 = vmatprep.subr.bf16.mxu0 0
        %547 = vmatpush1.bf16.msra.mxu0 0
        %548 = vmatprep.subr.bf16.mxu0 0
        %549 = vmatpush1.bf16.msra.mxu0 0
        %550 = vmatprep.subr.bf16.mxu0 0
        %551 = vmatpush1.bf16.msra.mxu0 0
        %552 = vmatprep.subr.bf16.mxu0 0
        %553 = vmatpush1.bf16.msra.mxu0 0
        %554 = vmatprep.subr.bf16.mxu0 0
        %555 = vmatpush1.bf16.msra.mxu0 0
        %556 = vmatprep.subr.bf16.mxu0 0
        %557 = vmatpush1.bf16.msra.mxu0 0
        %558 = vmatprep.subr.bf16.mxu0 0
        %559 = vmatpush1.bf16.msra.mxu0 0
        %560 = vmatprep.subr.bf16.mxu0 0
        %561 = vmatpush1.bf16.msra.mxu0 0
        %562 = vmatprep.subr.bf16.mxu0 0
        %563 = vmatpush1.bf16.msra.mxu0 0
        %564 = vmatprep.subr.bf16.mxu0 0
        %565 = vmatpush1.bf16.msra.mxu0 0
        %566 = vmatprep.subr.bf16.mxu0 0
        %567 = vmatpush1.bf16.msra.mxu0 0
        %568 = vmatprep.subr.bf16.mxu0 0
        %569 = vmatpush1.bf16.msra.mxu0 0
        %570 = vmatprep.mubr.bf16.mxu0 0
        %571 = vmatmul.mubr.bf16.gmra.mrb[0].mxu0 %v527
        %v572 = vpop.f32.mrb[0].mxu0
        %v573 = vadd.f32 0.0, %v572
        %v574 = vpop.f32.mrb[0].mxu0
        %v575 = vadd.f32 0.0, %v574
        %v576 = vpop.f32.mrb[0].mxu0
        %v577 = vadd.f32 0.0, %v576
        %v578 = vpop.f32.mrb[0].mxu0
        %v579 = vadd.f32 0.0, %v578
        %580 = vmatprep.mubr.bf16.mxu0 0
        %581 = vmatmul.mubr.bf16.gmra.mrb[0].mxu0 %v530
        %v582 = vpop.f32.mrb[0].mxu0
        %v583 = vadd.f32 0.0, %v582
        %v584 = vpop.f32.mrb[0].mxu0
        %v585 = vadd.f32 0.0, %v584
        %v586 = vpop.f32.mrb[0].mxu0
        %v587 = vadd.f32 0.0, %v586
        %v588 = vpop.f32.mrb[0].mxu0
        %v589 = vadd.f32 0.0, %v588
        %590 = vmatprep.mubr.bf16.mxu0 0
        %591 = vmatmul.mubr.bf16.gmra.mrb[0].mxu0 %v533
        %v592 = vpop.f32.mrb[0].mxu0
        %v593 = vadd.f32 0.0, %v592
        %v594 = vpop.f32.mrb[0].mxu0
        %v595 = vadd.f32 0.0, %v594
        %v596 = vpop.f32.mrb[0].mxu0
        %v597 = vadd.f32 0.0, %v596
        %v598 = vpop.f32.mrb[0].mxu0
        %v599 = vadd.f32 0.0, %v598
        %600 = vmatprep.mubr.bf16.mxu0 0
        %601 = vmatmul.mubr.bf16.gmra.mrb[0].mxu0 %v536
        %v602 = vpop.f32.mrb[0].mxu0
        %v603 = vadd.f32 0.0, %v602
        %v604 = vpop.f32.mrb[0].mxu0
        %v605 = vadd.f32 0.0, %v604
        %v606 = vpop.f32.mrb[0].mxu0
        %v607 = vadd.f32 0.0, %v606
        %v608 = vpop.f32.mrb[0].mxu0
        %v609 = vadd.f32 0.0, %v608
        %610 = vdwg.mxu0
        %611 = vmatprep.subr.bf16.mxu0 %v500
        %612 = vmatpush1.bf16.msra.mxu0 %v499
        %613 = vmatprep.subr.bf16.mxu0 %v504
        %614 = vmatpush1.bf16.msra.mxu0 %v503
        %615 = vmatprep.subr.bf16.mxu0 0
        %616 = vmatpush1.bf16.msra.mxu0 0
        %617 = vmatprep.subr.bf16.mxu0 0
        %618 = vmatpush1.bf16.msra.mxu0 0
        %619 = vmatprep.subr.bf16.mxu0 0
        %620 = vmatpush1.bf16.msra.mxu0 0
        %621 = vmatprep.subr.bf16.mxu0 0
        %622 = vmatpush1.bf16.msra.mxu0 0
        %623 = vmatprep.subr.bf16.mxu0 0
        %624 = vmatpush1.bf16.msra.mxu0 0
        %625 = vmatprep.subr.bf16.mxu0 0
        %626 = vmatpush1.bf16.msra.mxu0 0
        %627 = vmatprep.subr.bf16.mxu0 0
        %628 = vmatpush1.bf16.msra.mxu0 0
        %629 = vmatprep.subr.bf16.mxu0 0
        %630 = vmatpush1.bf16.msra.mxu0 0
        %631 = vmatprep.subr.bf16.mxu0 0
        %632 = vmatpush1.bf16.msra.mxu0 0
        %633 = vmatprep.subr.bf16.mxu0 0
        %634 = vmatpush1.bf16.msra.mxu0 0
        %635 = vmatprep.subr.bf16.mxu0 0
        %636 = vmatpush1.bf16.msra.mxu0 0
        %637 = vmatprep.subr.bf16.mxu0 0
        %638 = vmatpush1.bf16.msra.mxu0 0
        %639 = vmatprep.subr.bf16.mxu0 0
        %640 = vmatpush1.bf16.msra.mxu0 0
        %641 = vmatprep.subr.bf16.mxu0 0
        %642 = vmatpush1.bf16.msra.mxu0 0
        %643 = vmatprep.mubr.bf16.mxu0 0
        %644 = vmatmul.mubr.bf16.gmra.mrb[0].mxu0 %v527
        %v645 = vpop.f32.mrb[0].mxu0
        %v646 = vadd.f32 0.0, %v645
        %v647 = vpop.f32.mrb[0].mxu0
        %v648 = vadd.f32 0.0, %v647
        %v649 = vpop.f32.mrb[0].mxu0
        %v650 = vadd.f32 0.0, %v649
        %v651 = vpop.f32.mrb[0].mxu0
        %v652 = vadd.f32 0.0, %v651
        %653 = vmatprep.mubr.bf16.mxu0 0
        %654 = vmatmul.mubr.bf16.gmra.mrb[0].mxu0 %v530
        %v655 = vpop.f32.mrb[0].mxu0
        %v656 = vadd.f32 0.0, %v655
        %v657 = vpop.f32.mrb[0].mxu0
        %v658 = vadd.f32 0.0, %v657
        %v659 = vpop.f32.mrb[0].mxu0
        %v660 = vadd.f32 0.0, %v659
        %v661 = vpop.f32.mrb[0].mxu0
        %v662 = vadd.f32 0.0, %v661
        %663 = vmatprep.mubr.bf16.mxu0 0
        %664 = vmatmul.mubr.bf16.gmra.mrb[0].mxu0 %v533
        %v665 = vpop.f32.mrb[0].mxu0
        %v666 = vadd.f32 0.0, %v665
        %v667 = vpop.f32.mrb[0].mxu0
        %v668 = vadd.f32 0.0, %v667
        %v669 = vpop.f32.mrb[0].mxu0
        %v670 = vadd.f32 0.0, %v669
        %v671 = vpop.f32.mrb[0].mxu0
        %v672 = vadd.f32 0.0, %v671
        %673 = vmatprep.mubr.bf16.mxu0 0
        %674 = vmatmul.mubr.bf16.gmra.mrb[0].mxu0 %v536
        %v675 = vpop.f32.mrb[0].mxu0
        %v676 = vadd.f32 0.0, %v675
        %v677 = vpop.f32.mrb[0].mxu0
        %v678 = vadd.f32 0.0, %v677
        %v679 = vpop.f32.mrb[0].mxu0
        %v680 = vadd.f32 0.0, %v679
        %v681 = vpop.f32.mrb[0].mxu0
        %v682 = vadd.f32 0.0, %v681
        %683 = vdwg.mxu0
        %v684 = vmul.f32 %v573, %v489
        %v685 = vmul.f32 %v575, %v490
        %v686 = vmul.f32 %v646, %v491
        %v687 = vmul.f32 %v648, %v492
        %v688 = vmul.f32 %v577, %v493
        %v689 = vmul.f32 %v579, %v494
        %v690 = vmul.f32 %v650, %v495
        %v691 = vmul.f32 %v652, %v496
        %v692 = vmul.f32 %v583, %v489
        %v693 = vmul.f32 %v585, %v490
        %v694 = vmul.f32 %v656, %v491
        %v695 = vmul.f32 %v658, %v492
        %v696 = vmul.f32 %v587, %v493
        %v697 = vmul.f32 %v589, %v494
        %v698 = vmul.f32 %v660, %v495
        %v699 = vmul.f32 %v662, %v496
        %v700 = vmul.f32 %v593, %v489
        %v701 = vmul.f32 %v595, %v490
        %v702 = vmul.f32 %v666, %v491
        %v703 = vmul.f32 %v668, %v492
        %v704 = vmul.f32 %v597, %v493
        %v705 = vmul.f32 %v599, %v494
        %v706 = vmul.f32 %v670, %v495
        %v707 = vmul.f32 %v672, %v496
        %v708 = vmul.f32 %v603, %v489
        %v709 = vmul.f32 %v605, %v490
        %v710 = vmul.f32 %v676, %v491
        %v711 = vmul.f32 %v678, %v492
        %v712 = vmul.f32 %v607, %v493
        %v713 = vmul.f32 %v609, %v494
        %v714 = vmul.f32 %v680, %v495
        %v715 = vmul.f32 %v682, %v496
        %v716 = vadd.f32 %v684, %v688
        %v717 = vrot.slane %v716, 4
        %v718 = vadd.f32 %v716, %v717
        %v719 = vrot.slane %v718, 2
        %v720 = vadd.f32 %v718, %v719
        %v721 = vrot.slane %v720, 1
        %v722 = vadd.f32 %v720, %v721
        %v723 = vadd.f32 %v685, %v689
        %v724 = vrot.slane %v723, 4
        %v725 = vadd.f32 %v723, %v724
        %v726 = vrot.slane %v725, 2
        %v727 = vadd.f32 %v725, %v726
        %v728 = vrot.slane %v727, 1
        %v729 = vadd.f32 %v727, %v728
        %v730 = vadd.f32 %v686, %v690
        %v731 = vrot.slane %v730, 4
        %v732 = vadd.f32 %v730, %v731
        %v733 = vrot.slane %v732, 2
        %v734 = vadd.f32 %v732, %v733
        %v735 = vrot.slane %v734, 1
        %v736 = vadd.f32 %v734, %v735
        %v737 = vadd.f32 %v687, %v691
        %v738 = vrot.slane %v737, 4
        %v739 = vadd.f32 %v737, %v738
        %v740 = vrot.slane %v739, 2
        %v741 = vadd.f32 %v739, %v740
        %v742 = vrot.slane %v741, 1
        %v743 = vadd.f32 %v741, %v742
        %v744 = vadd.f32 %v692, %v696
        %v745 = vrot.slane %v744, 4
        %v746 = vadd.f32 %v744, %v745
        %v747 = vrot.slane %v746, 2
        %v748 = vadd.f32 %v746, %v747
        %v749 = vrot.slane %v748, 1
        %v750 = vadd.f32 %v748, %v749
        %v751 = vadd.f32 %v693, %v697
        %v752 = vrot.slane %v751, 4
        %v753 = vadd.f32 %v751, %v752
        %v754 = vrot.slane %v753, 2
        %v755 = vadd.f32 %v753, %v754
        %v756 = vrot.slane %v755, 1
        %v757 = vadd.f32 %v755, %v756
        %v758 = vadd.f32 %v694, %v698
        %v759 = vrot.slane %v758, 4
        %v760 = vadd.f32 %v758, %v759
        %v761 = vrot.slane %v760, 2
        %v762 = vadd.f32 %v760, %v761
        %v763 = vrot.slane %v762, 1
        %v764 = vadd.f32 %v762, %v763
        %v765 = vadd.f32 %v695, %v699
        %v766 = vrot.slane %v765, 4
        %v767 = vadd.f32 %v765, %v766
        %v768 = vrot.slane %v767, 2
        %v769 = vadd.f32 %v767, %v768
        %v770 = vrot.slane %v769, 1
        %v771 = vadd.f32 %v769, %v770
        %v772 = vadd.f32 %v700, %v704
        %v773 = vrot.slane %v772, 4
        %v774 = vadd.f32 %v772, %v773
        %v775 = vrot.slane %v774, 2
        %v776 = vadd.f32 %v774, %v775
        %v777 = vrot.slane %v776, 1
        %v778 = vadd.f32 %v776, %v777
        %v779 = vadd.f32 %v701, %v705
        %v780 = vrot.slane %v779, 4
        %v781 = vadd.f32 %v779, %v780
        %v782 = vrot.slane %v781, 2
        %v783 = vadd.f32 %v781, %v782
        %v784 = vrot.slane %v783, 1
        %v785 = vadd.f32 %v783, %v784
        %v786 = vadd.f32 %v702, %v706
        %v787 = vrot.slane %v786, 4
        %v788 = vadd.f32 %v786, %v787
        %v789 = vrot.slane %v788, 2
        %v790 = vadd.f32 %v788, %v789
        %v791 = vrot.slane %v790, 1
        %v792 = vadd.f32 %v790, %v791
        %v793 = vadd.f32 %v703, %v707
        %v794 = vrot.slane %v793, 4
        %v795 = vadd.f32 %v793, %v794
        %v796 = vrot.slane %v795, 2
        %v797 = vadd.f32 %v795, %v796
        %v798 = vrot.slane %v797, 1
        %v799 = vadd.f32 %v797, %v798
        %v800 = vadd.f32 %v708, %v712
        %v801 = vrot.slane %v800, 4
        %v802 = vadd.f32 %v800, %v801
        %v803 = vrot.slane %v802, 2
        %v804 = vadd.f32 %v802, %v803
        %v805 = vrot.slane %v804, 1
        %v806 = vadd.f32 %v804, %v805
        %v807 = vadd.f32 %v709, %v713
        %v808 = vrot.slane %v807, 4
        %v809 = vadd.f32 %v807, %v808
        %v810 = vrot.slane %v809, 2
        %v811 = vadd.f32 %v809, %v810
        %v812 = vrot.slane %v811, 1
        %v813 = vadd.f32 %v811, %v812
        %v814 = vadd.f32 %v710, %v714
        %v815 = vrot.slane %v814, 4
        %v816 = vadd.f32 %v814, %v815
        %v817 = vrot.slane %v816, 2
        %v818 = vadd.f32 %v816, %v817
        %v819 = vrot.slane %v818, 1
        %v820 = vadd.f32 %v818, %v819
        %v821 = vadd.f32 %v711, %v715
        %v822 = vrot.slane %v821, 4
        %v823 = vadd.f32 %v821, %v822
        %v824 = vrot.slane %v823, 2
        %v825 = vadd.f32 %v823, %v824
        %v826 = vrot.slane %v825, 1
        %v827 = vadd.f32 %v825, %v826
        %v844 = vcombine.low %v722, %v729
        %v845 = vcombine.low %v736, %v743
        %v846 = vcombine.low %v750, %v757
        %v847 = vcombine.low %v764, %v771
        %v848 = vcombine.low %v778, %v785
        %v849 = vcombine.low %v792, %v799
        %v850 = vcombine.low %v806, %v813
        %v851 = vcombine.low %v820, %v827
        %v852 = vrot.slane %v846, 7
        %vm853 = vcmask 1041409
        %v854 = vsel %vm853, %v852, %v844
        %vm855 = vcmask 1045509
        %v856 = vsel %vm855, %v852, %v854
        %v857 = vrot.slane %v848, 6
        %vm858 = vcmask 1042434
        %v859 = vsel %vm858, %v857, %v856
        %vm860 = vcmask 1046534
        %v861 = vsel %vm860, %v857, %v859
        %v862 = vrot.slane %v850, 5
        %vm863 = vcmask 1043459
        %v864 = vsel %vm863, %v862, %v861
        %vm865 = vcmask 1047559
        %v866 = vsel %vm865, %v862, %v864
        %v867 = vrot.slane %v847, 7
        %v868 = vsel %vm853, %v867, %v845
        %v869 = vsel %vm855, %v867, %v868
        %v870 = vrot.slane %v849, 6
        %v871 = vsel %vm858, %v870, %v869
        %v872 = vsel %vm860, %v870, %v871
        %v873 = vrot.slane %v851, 5
        %v874 = vsel %vm863, %v873, %v872
        %v875 = vsel %vm865, %v873, %v874
        %v878 = vsub.f32 %v315, %v866
        %v879 = vsub.f32 %v316, %v875
        %v880 = vand.u32 2147483647, %v878
        %v881 = vand.u32 2147483647, %v879
        %v884 = vcombine.high %v880, %v880
        %v885 = vcombine.high %v881, %v881
        %vm888 = vcmask 1043456
        %v889 = vsel %vm888, %v880, 0.0
        %v890 = vrot.slane %v889, 4
        %v891 = vadd.f32 %v889, %v890
        %v892 = vrot.slane %v891, 2
        %v893 = vadd.f32 %v891, %v892
        %v894 = vrot.slane %v893, 1
        %v895 = vadd.f32 %v893, %v894
        %v896 = vsel %vm888, %v884, 0.0
        %v897 = vrot.slane %v896, 4
        %v898 = vadd.f32 %v896, %v897
        %v899 = vrot.slane %v898, 2
        %v900 = vadd.f32 %v898, %v899
        %v901 = vrot.slane %v900, 1
        %v902 = vadd.f32 %v900, %v901
        %v903 = vsel %vm888, %v881, 0.0
        %v904 = vrot.slane %v903, 4
        %v905 = vadd.f32 %v903, %v904
        %v906 = vrot.slane %v905, 2
        %v907 = vadd.f32 %v905, %v906
        %v908 = vrot.slane %v907, 1
        %v909 = vadd.f32 %v907, %v908
        %v910 = vsel %vm888, %v885, 0.0
        %v911 = vrot.slane %v910, 4
        %v912 = vadd.f32 %v910, %v911
        %v913 = vrot.slane %v912, 2
        %v914 = vadd.f32 %v912, %v913
        %v915 = vrot.slane %v914, 1
        %v916 = vadd.f32 %v914, %v915
        %v921 = vcombine.low %v895, %v902
        %v922 = vcombine.low %v909, %v916
        %v924 = vunpack.c.l.s4 1966171168
        %v925 = vunpack.c.0.s8 %v924
        %v926 = vlaneseq
        %v927 = vshrl.u32 %v926, 7
        %v928 = vsub.s32 %v925, %v927
        %v929 = vrot.slane %v921, %v928
        %v931 = vunpack.c.l.s4 1966171168
        %v932 = vunpack.c.0.s8 %v931
        %v933 = vlaneseq
        %v934 = vshrl.u32 %v933, 7
        %v935 = vsub.s32 %v932, %v934
        %v936 = vrot.slane %v922, %v935
        %v937 = vcombine.low %v929, %v936
        %v939 = vunpack.c.l.s4 1966171168
        %v940 = vunpack.c.0.s8 %v939
        %v941 = vlaneseq
        %v942 = vshrl.u32 %v941, 7
        %v943 = vsub.s32 %v940, %v942
        %v944 = vrot.slane %v937, %v943
        %v946 = vlaneseq
        %vm947 = vcmp.ge.s32.totalorder %v946, 0
        %vm948 = vcmp.lt.s32.totalorder %v946, 512
        %vm949 = vmand %vm947, %vm948
        %950 = vst.msk [vmem:[%s272] sm:$0xf] %vm949, %v944
        %s951 = sand.u32 %s148, 1
        %s952 = scalar_lea.sflag [#allocation3], %s951
        %s953 = sand.u32 %s148, 1
        %s954 = smul.addr %s953, 4
        %s955 = scalar_lea.vmem [#allocation2], %s954
        // Predicated region
        $region37: #{tpu_custom_call.1} parent=35 // pred_check
          %p956 = pneg %p158
        $region38: #{tpu_custom_call.1} parent=35 // pred_check_branch
          %958 = sbr.rel (%p956) target = $region40
        $region39: #{tpu_custom_call.1} parent=35 // pred_region
          %s960 = ssub.s32 64, 64
          %961 = vsyncadd %s952, %s960
          %s962 = smul.addr %s23, 4
          %s963 = smul.addr %s22, 4
          %s964 = sadd.s32 %s962, %s963
          %s965 = smul.addr %s964, 16
          %s966 = scalar_lea.hbm %s4, %s965
          %s968 = sshll.u32 %s955, 4
          %s969 = int_to_ptr.vmem [resolvable:$true] %s968
          %971 = dma.vmem_to_hbm [thread:$0]  %s969, 64, %s966, %s952
        $region40: #{tpu_custom_call.1} parent=35 // pred_fallthru
          _
      $region36: #{tpu_custom_call.1} parent=5 // pred_fallthru
        _
      %p972 = scmp.le.s32.totalorder 2, %s13
      // Predicated region
      $region41: #{tpu_custom_call.1} parent=5 // pred_check
        %p973 = pneg %p972
      $region42: #{tpu_custom_call.1} parent=5 // pred_check_branch
        %975 = sbr.rel (%p973) target = $region44
      $region43: #{tpu_custom_call.1} parent=5 // pred_region
        %s976 = ssub.s32 %s13, 2
        // Predicated region
        $region45: #{tpu_custom_call.1} parent=43 // pred_check
          %p977 = pneg %p164
        $region46: #{tpu_custom_call.1} parent=43 // pred_check_branch
          %979 = sbr.rel (%p977) target = $region48
        $region47: #{tpu_custom_call.1} parent=43 // pred_region
          %s980 = sand.u32 %s149, 1
          %s981 = scalar_lea.sflag [#allocation3], %s980
          %s982 = sand.u32 %s149, 1
          %s983 = smul.addr %s982, 4
          %s984 = scalar_lea.vmem [#allocation2], %s983
          %985 = dma.done %s981, 64
        $region48: #{tpu_custom_call.1} parent=43 // pred_fallthru
          _
      $region44: #{tpu_custom_call.1} parent=5 // pred_fallthru
        _
    $region6: #{tpu_custom_call.1} parent=1 // loop_footer
      %s17 = sadd.s32 1, %s13
    $region7: #{tpu_custom_call.1} parent=1 // loop_footer_branch
      %12 = sbr.rel target = $region3
    $region8: #{tpu_custom_call.1} parent=1 // loop_exit
      _
    %986 = vsyncpa [#allocation3], 1
    %s987 = scalar_lea.sflag [#allocation3], 1
    %988 = vsyncpa %s987, 1

</llo_original>
